<compile_context>
chip_gen: v7x
topology: tpu7x:2x2x1
jax: 0.10.0
libtpu: 0.0.40
codegen_flags: <defaults>
</compile_context>

<pallas_src>
import functools

import jax
import jax.numpy as jnp
from jax.experimental import pallas as pl
from jax.experimental.pallas import tpu as pltpu

INPUT_DIM = 784
NUM_CENTERS = 10
NUM_CLASS = 10


def _rbf_forward_kernel(x_ref, ct_ref, c2_ref, beta_ref, wt_ref, b_ref, out_ref):
    """One batch tile.

    x_ref   : (TILE_N, D)          f32  (streamed from HBM)
    ct_ref  : (D, C)               centers^T, resident
    c2_ref  : (1, C)               precomputed ||centers||^2, resident
    beta_ref: (1, C)
    wt_ref  : (C, num_class)       linear weight^T, resident
    b_ref   : (1, num_class)
    out_ref : (TILE_N, num_class)  f32
    """
    tn, d = x_ref.shape

    # Row squared norms accumulated over 128-wide column chunks: avoids a
    # full (TILE_N, D) f32 elementwise temporary in VMEM.
    x2 = jnp.zeros((tn, 1), dtype=jnp.float32)
    for start in range(0, d, 128):
        width = min(128, d - start)
        xs = x_ref[:, start:start + width].astype(jnp.float32)
        x2 = x2 + jnp.sum(xs * xs, axis=1, keepdims=True)

    # Cross term on the MXU, f32 accumulation: (TILE_N, D) @ (D, C).
    xc = jnp.dot(x_ref[...], ct_ref[...], preferred_element_type=jnp.float32)

    # ||x - c||^2 = ||x||^2 + ||c||^2 - 2 x.c  (clamp fp noise before sqrt).
    d2 = x2 + c2_ref[...] - 2.0 * xc
    dist = jnp.sqrt(jnp.maximum(d2, 0.0))
    rbf = jnp.exp(-beta_ref[...] * dist)                 # (TILE_N, C)

    logits = jnp.dot(rbf, wt_ref[...], preferred_element_type=jnp.float32)
    # Output lane width (num_class=10) < 128 -> masked stores; writeback is
    # ~1% of the x stream so this is deliberately left alone.
    out_ref[...] = logits + b_ref[...]


def _round_up(v, m):
    return ((v + m - 1) // m) * m


@functools.partial(jax.jit, static_argnames=("tile_n",))
def rbf_net_forward(x_nchw, centers, beta, w, b, *, tile_n=2048):
    # Flatten NCHW -> (N, D), exactly like x.view(n_input, -1).  The reshape
    # is a bitcast and the astype is a no-op for f32 input, so nothing to
    # fuse into the pallas_call input stream.
    n = x_nchw.shape[0]
    x = x_nchw.reshape(n, -1).astype(jnp.float32)
    d = x.shape[1]
    c_num = centers.shape[0]
    n_class = w.shape[0]

    # --- Batch tile size (no padding; partial last block is allowed). ---
    if n <= 8:
        tn = n                                        # single full block
    else:
        tn = min(tile_n, _round_up(n, 8))
        # Guarantee >= 2 batch tiles so ("parallel",) can shard the grid
        # across v7x's two TensorCores (no-op on single-TC v5e / v6e).
        tn = min(tn, _round_up((n + 1) // 2, 8))
        tn = max(8, _round_up(tn, 8))
    grid = (pl.cdiv(n, tn),)

    # --- Tiny resident operands (pre-transposed / precomputed once). ---
    centers_f = centers.astype(jnp.float32)
    centers_t = centers_f.T                                      # (D, C)
    c2 = jnp.sum(centers_f * centers_f, axis=1).reshape(1, -1)   # (1, C)
    w_t = w.astype(jnp.float32).T                                # (C, n_class)
    b2 = b.astype(jnp.float32).reshape(1, -1)                    # (1, n_class)
    beta2 = beta.astype(jnp.float32).reshape(1, -1)              # (1, C)

    # VMEM budget: double-buffered x tile (rows lane-padded to 128) plus
    # headroom for the output double-buffer and elementwise temps.  Capped at
    # 48 MiB so the same build stays inside v7x's 64 MiB physical VMEM.
    x_row_bytes = _round_up(d, 128) * 4
    vmem_limit = int(min(48 * 1024 * 1024,
                         max(32 * 1024 * 1024,
                             2 * tn * x_row_bytes + 20 * 1024 * 1024)))

    cost = pl.CostEstimate(
        flops=2 * n * d * c_num              # cross-term matmul
              + 2 * n * c_num * n_class      # linear layer
              + 6 * n * c_num,               # d2 / dist / rbf elementwise
        transcendentals=2 * n * c_num,       # sqrt + exp
        bytes_accessed=n * d * 4             # x stream (dominant)
                       + n * n_class * 4     # output writeback
                       + d * c_num * 4,      # centers
    )

    out = pl.pallas_call(
        _rbf_forward_kernel,
        out_shape=jax.ShapeDtypeStruct((n, n_class), jnp.float32),
        grid=grid,
        in_specs=[
            pl.BlockSpec((tn, d), lambda i: (i, 0)),            # x tile (streamed)
            pl.BlockSpec((d, c_num), lambda i: (0, 0)),         # centers^T (resident)
            pl.BlockSpec((1, c_num), lambda i: (0, 0)),         # ||c||^2
            pl.BlockSpec((1, c_num), lambda i: (0, 0)),         # beta
            pl.BlockSpec((c_num, n_class), lambda i: (0, 0)),   # W^T
            pl.BlockSpec((1, n_class), lambda i: (0, 0)),       # bias
        ],
        out_specs=pl.BlockSpec((tn, n_class), lambda i: (i, 0)),
        compiler_params=pltpu.CompilerParams(
            dimension_semantics=("parallel",),      # shard batch tiles across TCs
            vmem_limit_bytes=vmem_limit,
        ),
        cost_estimate=cost,
    )(x, centers_t, c2, beta2, w_t, b2)

    return out


def _reference(x_nchw, centers, beta, w, b):
    n = x_nchw.shape[0]
    x = x_nchw.reshape(n, -1).astype(jnp.float32)
    diff = x[:, None, :] - centers[None, :, :]           # (N, C, D)
    dist = jnp.sqrt(jnp.sum(diff * diff, axis=2))        # (N, C)
    rbf = jnp.exp(-beta * dist)                          # (N, C)
    return rbf @ w.T + b.reshape(1, -1)


if __name__ == "__main__":
    key = jax.random.PRNGKey(0)
    k_x, k_c, k_w, k_b = jax.random.split(key, 4)

    batch = 12  # exercises the 2-tile grid + partial last block path
    # NCHW "image" input (MNIST-like), flattened to input_dim=784 in the wrapper.
    x = jax.random.uniform(k_x, (batch, 1, 28, 28), dtype=jnp.float32)

    # TODO(synk): KMeans-based center init is training-time setup outside the
    # forward pass; deterministic random centers stand in for it here.
    centers = jax.random.uniform(k_c, (NUM_CENTERS, INPUT_DIM), dtype=jnp.float32)
    beta = jnp.ones((1, NUM_CENTERS), dtype=jnp.float32) / 10.0
    bound = 1.0 / jnp.sqrt(jnp.float32(NUM_CENTERS))
    w = jax.random.uniform(k_w, (NUM_CLASS, NUM_CENTERS), dtype=jnp.float32,
                           minval=-bound, maxval=bound)
    b = jax.random.uniform(k_b, (NUM_CLASS,), dtype=jnp.float32,
                           minval=-bound, maxval=bound)

    out = rbf_net_forward(x, centers, beta, w, b)
    out = jax.block_until_ready(out)

    ref = _reference(x, centers, beta, w, b)
    assert out.shape == (batch, NUM_CLASS)
    assert jnp.allclose(out, ref, rtol=1e-3, atol=1e-3), "mismatch vs reference"

    print("KERNEL_OK")
</pallas_src>

<mosaic_0001>
module attributes {stable_mosaic.version = 11 : i64} {
  func.func @_rbf_forward_kernel(%arg0: i32, %arg1: memref<8x784xf32, #tpu.memory_space<vmem>>, %arg2: memref<784x10xf32, #tpu.memory_space<vmem>>, %arg3: memref<1x10xf32, #tpu.memory_space<vmem>>, %arg4: memref<1x10xf32, #tpu.memory_space<vmem>>, %arg5: memref<10x10xf32, #tpu.memory_space<vmem>>, %arg6: memref<1x10xf32, #tpu.memory_space<vmem>>, %arg7: memref<8x10xf32, #tpu.memory_space<vmem>>) attributes {dimension_semantics = [#tpu.dimension_semantics<parallel>], iteration_bounds = array<i64: 2>, scalar_prefetch = 0 : i64, scratch_operands = 0 : i64, tpu.core_type = #tpu.core_type<tc>, window_params = [{transform_indices = @transform_0, window_bounds = array<i64: 8, 784>}, {pipeline_mode = #tpu.pipeline_mode<synchronous>, transform_indices = @transform_1, window_bounds = array<i64: 784, 10>}, {pipeline_mode = #tpu.pipeline_mode<synchronous>, transform_indices = @transform_2, window_bounds = array<i64: 1, 10>}, {pipeline_mode = #tpu.pipeline_mode<synchronous>, transform_indices = @transform_3, window_bounds = array<i64: 1, 10>}, {pipeline_mode = #tpu.pipeline_mode<synchronous>, transform_indices = @transform_4, window_bounds = array<i64: 10, 10>}, {pipeline_mode = #tpu.pipeline_mode<synchronous>, transform_indices = @transform_5, window_bounds = array<i64: 1, 10>}, {transform_indices = @transform_6, window_bounds = array<i64: 8, 10>}]} {
    %cst = arith.constant 0.000000e+00 : f32
    %0 = vector.broadcast %cst : f32 to vector<8x1xf32>
    %c0 = arith.constant 0 : index
    %c0_0 = arith.constant 0 : index
    %1 = vector.load %arg1[%c0, %c0_0] : memref<8x784xf32, #tpu.memory_space<vmem>>, vector<8x128xf32>
    %2 = arith.mulf %1, %1 : vector<8x128xf32>
    %cst_1 = arith.constant dense<0.000000e+00> : vector<8xf32>
    %3 = vector.multi_reduction <add>, %2, %cst_1 [1] : vector<8x128xf32> to vector<8xf32>
    %4 = vector.shape_cast %3 : vector<8xf32> to vector<8x1xf32>
    %5 = arith.addf %0, %4 : vector<8x1xf32>
    %c0_2 = arith.constant 0 : index
    %c128 = arith.constant 128 : index
    %6 = vector.load %arg1[%c0_2, %c128] : memref<8x784xf32, #tpu.memory_space<vmem>>, vector<8x128xf32>
    %7 = arith.mulf %6, %6 : vector<8x128xf32>
    %cst_3 = arith.constant dense<0.000000e+00> : vector<8xf32>
    %8 = vector.multi_reduction <add>, %7, %cst_3 [1] : vector<8x128xf32> to vector<8xf32>
    %9 = vector.shape_cast %8 : vector<8xf32> to vector<8x1xf32>
    %10 = arith.addf %5, %9 : vector<8x1xf32>
    %c0_4 = arith.constant 0 : index
    %c256 = arith.constant 256 : index
    %11 = vector.load %arg1[%c0_4, %c256] : memref<8x784xf32, #tpu.memory_space<vmem>>, vector<8x128xf32>
    %12 = arith.mulf %11, %11 : vector<8x128xf32>
    %cst_5 = arith.constant dense<0.000000e+00> : vector<8xf32>
    %13 = vector.multi_reduction <add>, %12, %cst_5 [1] : vector<8x128xf32> to vector<8xf32>
    %14 = vector.shape_cast %13 : vector<8xf32> to vector<8x1xf32>
    %15 = arith.addf %10, %14 : vector<8x1xf32>
    %c0_6 = arith.constant 0 : index
    %c384 = arith.constant 384 : index
    %16 = vector.load %arg1[%c0_6, %c384] : memref<8x784xf32, #tpu.memory_space<vmem>>, vector<8x128xf32>
    %17 = arith.mulf %16, %16 : vector<8x128xf32>
    %cst_7 = arith.constant dense<0.000000e+00> : vector<8xf32>
    %18 = vector.multi_reduction <add>, %17, %cst_7 [1] : vector<8x128xf32> to vector<8xf32>
    %19 = vector.shape_cast %18 : vector<8xf32> to vector<8x1xf32>
    %20 = arith.addf %15, %19 : vector<8x1xf32>
    %c0_8 = arith.constant 0 : index
    %c512 = arith.constant 512 : index
    %21 = vector.load %arg1[%c0_8, %c512] : memref<8x784xf32, #tpu.memory_space<vmem>>, vector<8x128xf32>
    %22 = arith.mulf %21, %21 : vector<8x128xf32>
    %cst_9 = arith.constant dense<0.000000e+00> : vector<8xf32>
    %23 = vector.multi_reduction <add>, %22, %cst_9 [1] : vector<8x128xf32> to vector<8xf32>
    %24 = vector.shape_cast %23 : vector<8xf32> to vector<8x1xf32>
    %25 = arith.addf %20, %24 : vector<8x1xf32>
    %c0_10 = arith.constant 0 : index
    %c640 = arith.constant 640 : index
    %26 = vector.load %arg1[%c0_10, %c640] : memref<8x784xf32, #tpu.memory_space<vmem>>, vector<8x128xf32>
    %27 = arith.mulf %26, %26 : vector<8x128xf32>
    %cst_11 = arith.constant dense<0.000000e+00> : vector<8xf32>
    %28 = vector.multi_reduction <add>, %27, %cst_11 [1] : vector<8x128xf32> to vector<8xf32>
    %29 = vector.shape_cast %28 : vector<8xf32> to vector<8x1xf32>
    %30 = arith.addf %25, %29 : vector<8x1xf32>
    %c0_12 = arith.constant 0 : index
    %c768 = arith.constant 768 : index
    %31 = vector.load %arg1[%c0_12, %c768] : memref<8x784xf32, #tpu.memory_space<vmem>>, vector<8x16xf32>
    %32 = arith.mulf %31, %31 : vector<8x16xf32>
    %cst_13 = arith.constant dense<0.000000e+00> : vector<8xf32>
    %33 = vector.multi_reduction <add>, %32, %cst_13 [1] : vector<8x16xf32> to vector<8xf32>
    %34 = vector.shape_cast %33 : vector<8xf32> to vector<8x1xf32>
    %35 = arith.addf %30, %34 : vector<8x1xf32>
    %c0_14 = arith.constant 0 : index
    %c0_15 = arith.constant 0 : index
    %36 = vector.load %arg1[%c0_14, %c0_15] : memref<8x784xf32, #tpu.memory_space<vmem>>, vector<8x784xf32>
    %c0_16 = arith.constant 0 : index
    %c0_17 = arith.constant 0 : index
    %37 = vector.load %arg2[%c0_16, %c0_17] : memref<784x10xf32, #tpu.memory_space<vmem>>, vector<784x10xf32>
    %cst_18 = arith.constant dense<0.000000e+00> : vector<8x10xf32>
    %38 = tpu.matmul %36, %37, %cst_18 {dimension_numbers = #tpu.dot_dimension_numbers<[1], [0], [0], [1], [0, 0, 1, 1], [], []>} : vector<8x784xf32>, vector<784x10xf32>, vector<8x10xf32> -> vector<8x10xf32>
    %c0_19 = arith.constant 0 : index
    %c0_20 = arith.constant 0 : index
    %39 = vector.load %arg3[%c0_19, %c0_20] : memref<1x10xf32, #tpu.memory_space<vmem>>, vector<1x10xf32>
    %40 = vector.broadcast %35 : vector<8x1xf32> to vector<8x10xf32>
    %41 = vector.broadcast %39 : vector<1x10xf32> to vector<8x10xf32>
    %42 = arith.addf %40, %41 : vector<8x10xf32>
    %cst_21 = arith.constant 2.000000e+00 : f32
    %43 = vector.broadcast %cst_21 : f32 to vector<8x10xf32>
    %44 = arith.mulf %43, %38 : vector<8x10xf32>
    %45 = arith.subf %42, %44 : vector<8x10xf32>
    %cst_22 = arith.constant 0.000000e+00 : f32
    %46 = vector.broadcast %cst_22 : f32 to vector<8x10xf32>
    %47 = arith.maximumf %45, %46 : vector<8x10xf32>
    %48 = math.sqrt %47 : vector<8x10xf32>
    %c0_23 = arith.constant 0 : index
    %c0_24 = arith.constant 0 : index
    %49 = vector.load %arg4[%c0_23, %c0_24] : memref<1x10xf32, #tpu.memory_space<vmem>>, vector<1x10xf32>
    %cst_25 = arith.constant 0.000000e+00 : f32
    %50 = vector.broadcast %cst_25 : f32 to vector<1x10xf32>
    %51 = arith.subf %50, %49 : vector<1x10xf32>
    %52 = vector.broadcast %51 : vector<1x10xf32> to vector<8x10xf32>
    %53 = arith.mulf %52, %48 : vector<8x10xf32>
    %54 = math.exp %53 : vector<8x10xf32>
    %c0_26 = arith.constant 0 : index
    %c0_27 = arith.constant 0 : index
    %55 = vector.load %arg5[%c0_26, %c0_27] : memref<10x10xf32, #tpu.memory_space<vmem>>, vector<10x10xf32>
    %cst_28 = arith.constant dense<0.000000e+00> : vector<8x10xf32>
    %56 = tpu.matmul %54, %55, %cst_28 {dimension_numbers = #tpu.dot_dimension_numbers<[1], [0], [0], [1], [0, 0, 1, 1], [], []>} : vector<8x10xf32>, vector<10x10xf32>, vector<8x10xf32> -> vector<8x10xf32>
    %c0_29 = arith.constant 0 : index
    %c0_30 = arith.constant 0 : index
    %57 = vector.load %arg6[%c0_29, %c0_30] : memref<1x10xf32, #tpu.memory_space<vmem>>, vector<1x10xf32>
    %58 = vector.broadcast %57 : vector<1x10xf32> to vector<8x10xf32>
    %59 = arith.addf %56, %58 : vector<8x10xf32>
    %c0_31 = arith.constant 0 : index
    %c0_32 = arith.constant 0 : index
    %60 = vector.load %arg7[%c0_31, %c0_32] : memref<8x10xf32, #tpu.memory_space<vmem>>, vector<8x10xf32>
    tpu.vector_store %arg7[%c0_31, %c0_32], %59 {strides = array<i32>} : memref<8x10xf32, #tpu.memory_space<vmem>>, vector<8x10xf32>,
    return
  }
  func.func @transform_0(%arg0: i32) -> (i32, i32) {
    %c0_i32 = arith.constant 0 : i32
    %c0_i32_0 = arith.constant 0 : i32
    return %arg0, %c0_i32 : i32, i32
  }
  func.func @transform_1(%arg0: i32) -> (i32, i32) {
    %c0_i32 = arith.constant 0 : i32
    %c0_i32_0 = arith.constant 0 : i32
    %c0_i32_1 = arith.constant 0 : i32
    return %c0_i32, %c0_i32_0 : i32, i32
  }
  func.func @transform_2(%arg0: i32) -> (i32, i32) {
    %c0_i32 = arith.constant 0 : i32
    %c0_i32_0 = arith.constant 0 : i32
    %c0_i32_1 = arith.constant 0 : i32
    return %c0_i32, %c0_i32_0 : i32, i32
  }
  func.func @transform_3(%arg0: i32) -> (i32, i32) {
    %c0_i32 = arith.constant 0 : i32
    %c0_i32_0 = arith.constant 0 : i32
    %c0_i32_1 = arith.constant 0 : i32
    return %c0_i32, %c0_i32_0 : i32, i32
  }
  func.func @transform_4(%arg0: i32) -> (i32, i32) {
    %c0_i32 = arith.constant 0 : i32
    %c0_i32_0 = arith.constant 0 : i32
    %c0_i32_1 = arith.constant 0 : i32
    return %c0_i32, %c0_i32_0 : i32, i32
  }
  func.func @transform_5(%arg0: i32) -> (i32, i32) {
    %c0_i32 = arith.constant 0 : i32
    %c0_i32_0 = arith.constant 0 : i32
    %c0_i32_1 = arith.constant 0 : i32
    return %c0_i32, %c0_i32_0 : i32, i32
  }
  func.func @transform_6(%arg0: i32) -> (i32, i32) {
    %c0_i32 = arith.constant 0 : i32
    %c0_i32_0 = arith.constant 0 : i32
    return %arg0, %c0_i32 : i32, i32
  }
}

</mosaic_0001>

<llo_original>
// kernel: rbf_net_forward.1
$region0: #{rbf_net_forward.1}
  #allocation0 [shape = 'u32[]', space=smem, size = 0x4, offset = 0x4, fixed_abs, tag = 'smem constant byte address 0x4 - core index']
  #allocation1 [shape = 'u32[144,128]{1,0:T(1,128)}', space=vmem, size = 0x12000, scoped, tag = 'internal scratch']
  %s0 = inlined_call_operand.vmem [shape: f32[12,784], index: 0, kind: input, shape index: {}]
  %s1 = inlined_call_operand.vmem [shape: f32[784,10], index: 1, kind: input, shape index: {}]
  %s2 = inlined_call_operand.vmem [shape: f32[1,10], index: 2, kind: input, shape index: {}]
  %s3 = inlined_call_operand.vmem [shape: f32[1,10], index: 3, kind: input, shape index: {}]
  %s4 = inlined_call_operand.vmem [shape: f32[10,10], index: 4, kind: input, shape index: {}]
  %s5 = inlined_call_operand.vmem [shape: f32[1,10], index: 5, kind: input, shape index: {}]
  %s6 = inlined_call_operand.hbm [shape: f32[12,10], index: 6, kind: output, shape index: {}]
  %s7 = sld [smem:[#allocation0]]
  $region57: #{rbf_net_forward.1} parent=0
    _
  %s9 = ssub.s32 1, %s7
  %s10 = scalar_select 0, %s9, %s7
  $region1: #{rbf_net_forward.1} parent=0
    #allocation2 [shape = 'u8[8192]{0}', space=vmem, size = 0x2000, scoped, tag = 'output window, operand 0']
    #allocation3 [shape = 's32[2]{0}', space=sflag, size = 0x8, scoped, tag = 'scoped memory for rbf_net_forward.1']
    %11 = vsyncpa [#allocation3], 0
    %s12 = scalar_lea.sflag [#allocation3], 1
    %13 = vsyncpa %s12, 0
    loop: start=0, step=1, limit=4
    $region2: #{rbf_net_forward.1} parent=1 // loop_pre_header
      _
    $region3: #{rbf_net_forward.1} parent=1 // loop_header
      %s15 = sphi 0, %s19
      %p16 = scmp.ge.s32.totalorder %s15, 4
      %s25 = sphi 0, %s27
      %s28 = sphi 0, %s25
      %s29 = sphi 0, %s28
      %s45 = sphi 0, %s29
      %s49 = sphi 0, %s49
      %s51 = sphi 0, %s49
      %s52 = sphi 0, %s51
      %s66 = sphi 0, %s52
      %s70 = sphi 0, %s70
      %s72 = sphi 0, %s70
      %s73 = sphi 0, %s72
      %s87 = sphi 0, %s73
      %s91 = sphi 0, %s91
      %s93 = sphi 0, %s91
      %s94 = sphi 0, %s93
      %s108 = sphi 0, %s94
      %s112 = sphi 0, %s112
      %s114 = sphi 0, %s112
      %s115 = sphi 0, %s114
      %s129 = sphi 0, %s115
      %s133 = sphi 0, %s133
      %s135 = sphi 0, %s133
      %s136 = sphi 0, %s135
      %s150 = sphi 0, %s136
      %s156 = sphi 0, %s158
      %s159 = sphi 0, %s156
      %s160 = sphi 0, %s159
      %s176 = sphi 0, %s160
    $region4: #{rbf_net_forward.1} parent=1 // loop_header_branch
      %18 = sbr.rel (%p16) target = $region8
    $region5: #{rbf_net_forward.1} parent=1 // loop_body
      %s20 = ssub.s32 %s15, 1
      %s21 = ssub.s32 %s15, 2
      %s22 = sadd.s32 %s15, 1
      %s23 = ssub.s32 %s15, %s22
      %p24 = scmp.eq.s32.totalorder %s23, 0
      %s26 = sadd.s32 %s25, 1
      %s27 = scalar_select %p24, %s25, %s26
      %p30 = pneg %p24
      %p31 = scmp.eq.s32.totalorder %s15, 1
      %p32 = por %p30, %p31
      %p33 = scmp.ne.s32.totalorder %s25, %s28
      %p34 = scmp.eq.s32.totalorder %s15, 0
      %p35 = por %p33, %p34
      %p36 = scmp.ne.s32.totalorder %s25, %s28
      %p37 = scmp.eq.s32.totalorder %s20, 1
      %p38 = por %p36, %p37
      %p39 = scmp.ne.s32.totalorder %s28, %s29
      %p40 = scmp.eq.s32.totalorder %s20, 0
      %p41 = por %p39, %p40
      %p42 = scmp.ne.s32.totalorder %s28, %s29
      %p43 = scmp.eq.s32.totalorder %s21, 1
      %p44 = por %p42, %p43
      %p46 = scmp.ne.s32.totalorder %s29, %s45
      %p47 = scmp.eq.s32.totalorder %s21, 0
      %p48 = por %p46, %p47
      %s50 = sadd.s32 %s49, 1
      %p53 = scmp.eq.s32.totalorder %s15, 1
      %p54 = scmp.ne.s32.totalorder %s49, %s51
      %p55 = scmp.eq.s32.totalorder %s15, 0
      %p56 = por %p54, %p55
      %p57 = scmp.ne.s32.totalorder %s49, %s51
      %p58 = scmp.eq.s32.totalorder %s20, 1
      %p59 = por %p57, %p58
      %p60 = scmp.ne.s32.totalorder %s51, %s52
      %p61 = scmp.eq.s32.totalorder %s20, 0
      %p62 = por %p60, %p61
      %p63 = scmp.ne.s32.totalorder %s51, %s52
      %p64 = scmp.eq.s32.totalorder %s21, 1
      %p65 = por %p63, %p64
      %p67 = scmp.ne.s32.totalorder %s52, %s66
      %p68 = scmp.eq.s32.totalorder %s21, 0
      %p69 = por %p67, %p68
      %s71 = sadd.s32 %s70, 1
      %p74 = scmp.eq.s32.totalorder %s15, 1
      %p75 = scmp.ne.s32.totalorder %s70, %s72
      %p76 = scmp.eq.s32.totalorder %s15, 0
      %p77 = por %p75, %p76
      %p78 = scmp.ne.s32.totalorder %s70, %s72
      %p79 = scmp.eq.s32.totalorder %s20, 1
      %p80 = por %p78, %p79
      %p81 = scmp.ne.s32.totalorder %s72, %s73
      %p82 = scmp.eq.s32.totalorder %s20, 0
      %p83 = por %p81, %p82
      %p84 = scmp.ne.s32.totalorder %s72, %s73
      %p85 = scmp.eq.s32.totalorder %s21, 1
      %p86 = por %p84, %p85
      %p88 = scmp.ne.s32.totalorder %s73, %s87
      %p89 = scmp.eq.s32.totalorder %s21, 0
      %p90 = por %p88, %p89
      %s92 = sadd.s32 %s91, 1
      %p95 = scmp.eq.s32.totalorder %s15, 1
      %p96 = scmp.ne.s32.totalorder %s91, %s93
      %p97 = scmp.eq.s32.totalorder %s15, 0
      %p98 = por %p96, %p97
      %p99 = scmp.ne.s32.totalorder %s91, %s93
      %p100 = scmp.eq.s32.totalorder %s20, 1
      %p101 = por %p99, %p100
      %p102 = scmp.ne.s32.totalorder %s93, %s94
      %p103 = scmp.eq.s32.totalorder %s20, 0
      %p104 = por %p102, %p103
      %p105 = scmp.ne.s32.totalorder %s93, %s94
      %p106 = scmp.eq.s32.totalorder %s21, 1
      %p107 = por %p105, %p106
      %p109 = scmp.ne.s32.totalorder %s94, %s108
      %p110 = scmp.eq.s32.totalorder %s21, 0
      %p111 = por %p109, %p110
      %s113 = sadd.s32 %s112, 1
      %p116 = scmp.eq.s32.totalorder %s15, 1
      %p117 = scmp.ne.s32.totalorder %s112, %s114
      %p118 = scmp.eq.s32.totalorder %s15, 0
      %p119 = por %p117, %p118
      %p120 = scmp.ne.s32.totalorder %s112, %s114
      %p121 = scmp.eq.s32.totalorder %s20, 1
      %p122 = por %p120, %p121
      %p123 = scmp.ne.s32.totalorder %s114, %s115
      %p124 = scmp.eq.s32.totalorder %s20, 0
      %p125 = por %p123, %p124
      %p126 = scmp.ne.s32.totalorder %s114, %s115
      %p127 = scmp.eq.s32.totalorder %s21, 1
      %p128 = por %p126, %p127
      %p130 = scmp.ne.s32.totalorder %s115, %s129
      %p131 = scmp.eq.s32.totalorder %s21, 0
      %p132 = por %p130, %p131
      %s134 = sadd.s32 %s133, 1
      %p137 = scmp.eq.s32.totalorder %s15, 1
      %p138 = scmp.ne.s32.totalorder %s133, %s135
      %p139 = scmp.eq.s32.totalorder %s15, 0
      %p140 = por %p138, %p139
      %p141 = scmp.ne.s32.totalorder %s133, %s135
      %p142 = scmp.eq.s32.totalorder %s20, 1
      %p143 = por %p141, %p142
      %p144 = scmp.ne.s32.totalorder %s135, %s136
      %p145 = scmp.eq.s32.totalorder %s20, 0
      %p146 = por %p144, %p145
      %p147 = scmp.ne.s32.totalorder %s135, %s136
      %p148 = scmp.eq.s32.totalorder %s21, 1
      %p149 = por %p147, %p148
      %p151 = scmp.ne.s32.totalorder %s136, %s150
      %p152 = scmp.eq.s32.totalorder %s21, 0
      %p153 = por %p151, %p152
      %s154 = ssub.s32 %s15, %s22
      %p155 = scmp.eq.s32.totalorder %s154, 0
      %s157 = sadd.s32 %s156, 1
      %s158 = scalar_select %p155, %s156, %s157
      %p161 = pneg %p155
      %p162 = scmp.eq.s32.totalorder %s15, 1
      %p163 = por %p161, %p162
      %p164 = scmp.ne.s32.totalorder %s156, %s159
      %p165 = scmp.eq.s32.totalorder %s15, 0
      %p166 = por %p164, %p165
      %p167 = scmp.ne.s32.totalorder %s156, %s159
      %p168 = scmp.eq.s32.totalorder %s20, 1
      %p169 = por %p167, %p168
      %p170 = scmp.ne.s32.totalorder %s159, %s160
      %p171 = scmp.eq.s32.totalorder %s20, 0
      %p172 = por %p170, %p171
      %p173 = scmp.ne.s32.totalorder %s159, %s160
      %p174 = scmp.eq.s32.totalorder %s21, 1
      %p175 = por %p173, %p174
      %p177 = scmp.ne.s32.totalorder %s160, %s176
      %p178 = scmp.eq.s32.totalorder %s21, 0
      %p179 = por %p177, %p178
      %p180 = scmp.le.s32.totalorder 1, %s15
      %p181 = scmp.lt.s32.totalorder %s15, 3
      %p182 = pnand %p180, %p181
      %p183 = pneg %p182
      // Predicated region
      $region9: #{rbf_net_forward.1} parent=5 // pred_check
        _
      $region10: #{rbf_net_forward.1} parent=5 // pred_check_branch
        %185 = sbr.rel (%p182) target = $region12
      $region11: #{rbf_net_forward.1} parent=5 // pred_region
        %s186 = ssub.s32 %s15, 1
        // Predicated region
        $region13: #{rbf_net_forward.1} parent=11 // pred_check
          %p187 = pneg %p62
        $region14: #{rbf_net_forward.1} parent=11 // pred_check_branch
          %189 = sbr.rel (%p187) target = $region16
        $region15: #{rbf_net_forward.1} parent=11 // pred_region
          _
        $region16: #{rbf_net_forward.1} parent=11 // pred_fallthru
          _
        // Predicated region
        $region17: #{rbf_net_forward.1} parent=11 // pred_check
          %p190 = pneg %p83
        $region18: #{rbf_net_forward.1} parent=11 // pred_check_branch
          %192 = sbr.rel (%p190) target = $region20
        $region19: #{rbf_net_forward.1} parent=11 // pred_region
          _
        $region20: #{rbf_net_forward.1} parent=11 // pred_fallthru
          _
        // Predicated region
        $region21: #{rbf_net_forward.1} parent=11 // pred_check
          %p193 = pneg %p104
        $region22: #{rbf_net_forward.1} parent=11 // pred_check_branch
          %195 = sbr.rel (%p193) target = $region24
        $region23: #{rbf_net_forward.1} parent=11 // pred_region
          _
        $region24: #{rbf_net_forward.1} parent=11 // pred_fallthru
          _
        // Predicated region
        $region25: #{rbf_net_forward.1} parent=11 // pred_check
          %p196 = pneg %p125
        $region26: #{rbf_net_forward.1} parent=11 // pred_check_branch
          %198 = sbr.rel (%p196) target = $region28
        $region27: #{rbf_net_forward.1} parent=11 // pred_region
          _
        $region28: #{rbf_net_forward.1} parent=11 // pred_fallthru
          _
        // Predicated region
        $region29: #{rbf_net_forward.1} parent=11 // pred_check
          %p199 = pneg %p146
        $region30: #{rbf_net_forward.1} parent=11 // pred_check_branch
          %201 = sbr.rel (%p199) target = $region32
        $region31: #{rbf_net_forward.1} parent=11 // pred_region
          _
        $region32: #{rbf_net_forward.1} parent=11 // pred_fallthru
          _
      $region12: #{rbf_net_forward.1} parent=5 // pred_fallthru
        _
      %p202 = scmp.lt.s32.totalorder %s15, 2
      // Predicated region
      $region33: #{rbf_net_forward.1} parent=5 // pred_check
        %p203 = pneg %p202
      $region34: #{rbf_net_forward.1} parent=5 // pred_check_branch
        %205 = sbr.rel (%p203) target = $region36
      $region35: #{rbf_net_forward.1} parent=5 // pred_region
        // Predicated region
        $region37: #{rbf_net_forward.1} parent=35 // pred_check
          %p206 = pneg %p35
        $region38: #{rbf_net_forward.1} parent=35 // pred_check_branch
          %208 = sbr.rel (%p206) target = $region40
        $region39: #{rbf_net_forward.1} parent=35 // pred_region
          %p209 = scmp.lt.s32.totalorder %s15, 1
          %s210 = scalar_select %p209, %s15, 1
          %s211 = smul.addr %s210, 7
          %s212 = smul.addr %s211, 8
          %s213 = scalar_lea.vmem %s0, %s212
        $region40: #{rbf_net_forward.1} parent=35 // pred_fallthru
          _
      $region36: #{rbf_net_forward.1} parent=5 // pred_fallthru
        _
      %p214 = scmp.le.s32.totalorder 1, %s15
      %p215 = scmp.lt.s32.totalorder %s15, 3
      %p216 = pnand %p214, %p215
      %p217 = pneg %p216
      // Predicated region
      $region41: #{rbf_net_forward.1} parent=5 // pred_check
        _
      $region42: #{rbf_net_forward.1} parent=5 // pred_check_branch
        %219 = sbr.rel (%p216) target = $region44
      $region43: #{rbf_net_forward.1} parent=5 // pred_region
        %s220 = ssub.s32 %s15, 1
        %p221 = scmp.lt.s32.totalorder %s20, 1
        %s222 = scalar_select %p221, %s20, 1
        %s223 = smul.addr %s222, 7
        %s224 = smul.addr %s223, 8
        %s225 = scalar_lea.vmem %s0, %s224
        %p226 = pneg %p41
        %p227 = pneg %p38
        %p228 = pneg %p62
        %p229 = pneg %p59
        %p230 = pneg %p83
        %p231 = pneg %p80
        %p232 = pneg %p104
        %p233 = pneg %p101
        %p234 = pneg %p125
        %p235 = pneg %p122
        %p236 = pneg %p146
        %p237 = pneg %p143
        %p238 = pneg %p172
        %p239 = pneg %p169
        %s240 = sand.u32 %s159, 1
        %s241 = scalar_lea.sflag [#allocation3], %s240
        %s242 = sand.u32 %s159, 1
        %s243 = smul.addr %s242, 8
        %s244 = scalar_lea.vmem [#allocation2], %s243
        %p245 = scmp.lt.s32.totalorder %s20, 1
        %s246 = scalar_select %p245, %s20, 1
        %s247 = smul.addr %s246, 7
        %s248 = smul.addr %s247, 8
        %s249 = scalar_lea.vmem %s0, %s248
        %v250 = vld [vmem:[%s249] sm:$0xff]
        %v251 = vmul.f32 %v250, %v250
        %252 = vadd.xlane.f32.xlu0 %v251
        %v253 = vpop.xlane.xlu0 %252
        %v254 = vadd.f32 %v253, 0.0
        %v255 = vld [vmem:[%s249 + $0x8] sm:$0xff]
        %v256 = vmul.f32 %v255, %v255
        %257 = vadd.xlane.f32.xlu0 %v256
        %v258 = vpop.xlane.xlu0 %257
        %v259 = vadd.f32 %v254, %v258
        %v260 = vld [vmem:[%s249 + $0x10] sm:$0xff]
        %v261 = vmul.f32 %v260, %v260
        %262 = vadd.xlane.f32.xlu0 %v261
        %v263 = vpop.xlane.xlu0 %262
        %v264 = vadd.f32 %v259, %v263
        %v265 = vld [vmem:[%s249 + $0x18] sm:$0xff]
        %v266 = vmul.f32 %v265, %v265
        %267 = vadd.xlane.f32.xlu0 %v266
        %v268 = vpop.xlane.xlu0 %267
        %v269 = vadd.f32 %v264, %v268
        %v270 = vld [vmem:[%s249 + $0x20] sm:$0xff]
        %v271 = vmul.f32 %v270, %v270
        %272 = vadd.xlane.f32.xlu0 %v271
        %v273 = vpop.xlane.xlu0 %272
        %v274 = vadd.f32 %v269, %v273
        %v275 = vld [vmem:[%s249 + $0x28] sm:$0xff]
        %v276 = vmul.f32 %v275, %v275
        %277 = vadd.xlane.f32.xlu0 %v276
        %v278 = vpop.xlane.xlu0 %277
        %v279 = vadd.f32 %v274, %v278
        %v280 = vld [vmem:[%s249 + $0x30] sm:$0xff]
        %v281 = vmul.f32 %v280, %v280
        %vm282 = vcmask 130048
        %v283 = vsel %vm282, %v281, 0.0
        %284 = vadd.xlane.f32.xlu0 %v283
        %v285 = vpop.xlane.xlu0 %284
        %v286 = vadd.f32 %v279, %v285
        %v287 = vld [vmem:[%s1] sm:$0xff]
        %v288 = vld [vmem:[%s1 + $0x8] sm:$0xff]
        %v289 = vld [vmem:[%s1 + $0x10] sm:$0xff]
        %v290 = vld [vmem:[%s1 + $0x18] sm:$0xff]
        %v291 = vld [vmem:[%s1 + $0x20] sm:$0xff]
        %v292 = vld [vmem:[%s1 + $0x28] sm:$0xff]
        %v293 = vld [vmem:[%s1 + $0x30] sm:$0xff]
        %v294 = vld [vmem:[%s1 + $0x38] sm:$0xff]
        %v295 = vld [vmem:[%s1 + $0x40] sm:$0xff]
        %v296 = vld [vmem:[%s1 + $0x48] sm:$0xff]
        %v297 = vld [vmem:[%s1 + $0x50] sm:$0xff]
        %v298 = vld [vmem:[%s1 + $0x58] sm:$0xff]
        %v299 = vld [vmem:[%s1 + $0x60] sm:$0xff]
        %v300 = vld [vmem:[%s1 + $0x68] sm:$0xff]
        %v301 = vld [vmem:[%s1 + $0x70] sm:$0xff]
        %v302 = vld [vmem:[%s1 + $0x78] sm:$0xff]
        %v303 = vld [vmem:[%s1 + $0x80] sm:$0xff]
        %v304 = vld [vmem:[%s1 + $0x88] sm:$0xff]
        %v305 = vld [vmem:[%s1 + $0x90] sm:$0xff]
        %v306 = vld [vmem:[%s1 + $0x98] sm:$0xff]
        %v307 = vld [vmem:[%s1 + $0xa0] sm:$0xff]
        %v308 = vld [vmem:[%s1 + $0xa8] sm:$0xff]
        %v309 = vld [vmem:[%s1 + $0xb0] sm:$0xff]
        %v310 = vld [vmem:[%s1 + $0xb8] sm:$0xff]
        %v311 = vld [vmem:[%s1 + $0xc0] sm:$0xff]
        %v312 = vld [vmem:[%s1 + $0xc8] sm:$0xff]
        %v313 = vld [vmem:[%s1 + $0xd0] sm:$0xff]
        %v314 = vld [vmem:[%s1 + $0xd8] sm:$0xff]
        %v315 = vld [vmem:[%s1 + $0xe0] sm:$0xff]
        %v316 = vld [vmem:[%s1 + $0xe8] sm:$0xff]
        %v317 = vld [vmem:[%s1 + $0xf0] sm:$0xff]
        %v318 = vld [vmem:[%s1 + $0xf8] sm:$0xff]
        %v319 = vld [vmem:[%s1 + $0x100] sm:$0xff]
        %v320 = vld [vmem:[%s1 + $0x108] sm:$0xff]
        %v321 = vld [vmem:[%s1 + $0x110] sm:$0xff]
        %v322 = vld [vmem:[%s1 + $0x118] sm:$0xff]
        %v323 = vld [vmem:[%s1 + $0x120] sm:$0xff]
        %v324 = vld [vmem:[%s1 + $0x128] sm:$0xff]
        %v325 = vld [vmem:[%s1 + $0x130] sm:$0xff]
        %v326 = vld [vmem:[%s1 + $0x138] sm:$0xff]
        %v327 = vld [vmem:[%s1 + $0x140] sm:$0xff]
        %v328 = vld [vmem:[%s1 + $0x148] sm:$0xff]
        %v329 = vld [vmem:[%s1 + $0x150] sm:$0xff]
        %v330 = vld [vmem:[%s1 + $0x158] sm:$0xff]
        %v331 = vld [vmem:[%s1 + $0x160] sm:$0xff]
        %v332 = vld [vmem:[%s1 + $0x168] sm:$0xff]
        %v333 = vld [vmem:[%s1 + $0x170] sm:$0xff]
        %v334 = vld [vmem:[%s1 + $0x178] sm:$0xff]
        %v335 = vld [vmem:[%s1 + $0x180] sm:$0xff]
        %v336 = vld [vmem:[%s1 + $0x188] sm:$0xff]
        %v337 = vld [vmem:[%s1 + $0x190] sm:$0xff]
        %v338 = vld [vmem:[%s1 + $0x198] sm:$0xff]
        %v339 = vld [vmem:[%s1 + $0x1a0] sm:$0xff]
        %v340 = vld [vmem:[%s1 + $0x1a8] sm:$0xff]
        %v341 = vld [vmem:[%s1 + $0x1b0] sm:$0xff]
        %v342 = vld [vmem:[%s1 + $0x1b8] sm:$0xff]
        %v343 = vld [vmem:[%s1 + $0x1c0] sm:$0xff]
        %v344 = vld [vmem:[%s1 + $0x1c8] sm:$0xff]
        %v345 = vld [vmem:[%s1 + $0x1d0] sm:$0xff]
        %v346 = vld [vmem:[%s1 + $0x1d8] sm:$0xff]
        %v347 = vld [vmem:[%s1 + $0x1e0] sm:$0xff]
        %v348 = vld [vmem:[%s1 + $0x1e8] sm:$0xff]
        %v349 = vld [vmem:[%s1 + $0x1f0] sm:$0xff]
        %v350 = vld [vmem:[%s1 + $0x1f8] sm:$0xff]
        %v351 = vld [vmem:[%s1 + $0x200] sm:$0xff]
        %v352 = vld [vmem:[%s1 + $0x208] sm:$0xff]
        %v353 = vld [vmem:[%s1 + $0x210] sm:$0xff]
        %v354 = vld [vmem:[%s1 + $0x218] sm:$0xff]
        %v355 = vld [vmem:[%s1 + $0x220] sm:$0xff]
        %v356 = vld [vmem:[%s1 + $0x228] sm:$0xff]
        %v357 = vld [vmem:[%s1 + $0x230] sm:$0xff]
        %v358 = vld [vmem:[%s1 + $0x238] sm:$0xff]
        %v359 = vld [vmem:[%s1 + $0x240] sm:$0xff]
        %v360 = vld [vmem:[%s1 + $0x248] sm:$0xff]
        %v361 = vld [vmem:[%s1 + $0x250] sm:$0xff]
        %v362 = vld [vmem:[%s1 + $0x258] sm:$0xff]
        %v363 = vld [vmem:[%s1 + $0x260] sm:$0xff]
        %v364 = vld [vmem:[%s1 + $0x268] sm:$0xff]
        %v365 = vld [vmem:[%s1 + $0x270] sm:$0xff]
        %v366 = vld [vmem:[%s1 + $0x278] sm:$0xff]
        %v367 = vld [vmem:[%s1 + $0x280] sm:$0xff]
        %v368 = vld [vmem:[%s1 + $0x288] sm:$0xff]
        %v369 = vld [vmem:[%s1 + $0x290] sm:$0xff]
        %v370 = vld [vmem:[%s1 + $0x298] sm:$0xff]
        %v371 = vld [vmem:[%s1 + $0x2a0] sm:$0xff]
        %v372 = vld [vmem:[%s1 + $0x2a8] sm:$0xff]
        %v373 = vld [vmem:[%s1 + $0x2b0] sm:$0xff]
        %v374 = vld [vmem:[%s1 + $0x2b8] sm:$0xff]
        %v375 = vld [vmem:[%s1 + $0x2c0] sm:$0xff]
        %v376 = vld [vmem:[%s1 + $0x2c8] sm:$0xff]
        %v377 = vld [vmem:[%s1 + $0x2d0] sm:$0xff]
        %v378 = vld [vmem:[%s1 + $0x2d8] sm:$0xff]
        %v379 = vld [vmem:[%s1 + $0x2e0] sm:$0xff]
        %v380 = vld [vmem:[%s1 + $0x2e8] sm:$0xff]
        %v381 = vld [vmem:[%s1 + $0x2f0] sm:$0xff]
        %v382 = vld [vmem:[%s1 + $0x2f8] sm:$0xff]
        %v383 = vld [vmem:[%s1 + $0x300] sm:$0xff]
        %v384 = vld [vmem:[%s1 + $0x308] sm:$0xff]
        %v386 = vsel %vm282, %v280, 0
        %388 = vmatprep.subr.mxu0 0.0
        %389 = vmatpush1.msra.mxu0 %v287
        %390 = vmatprep.subr.mxu0 0.0
        %391 = vmatpush1.msra.mxu0 %v288
        %392 = vmatprep.subr.mxu0 0.0
        %393 = vmatpush1.msra.mxu0 %v289
        %394 = vmatprep.subr.mxu0 0.0
        %395 = vmatpush1.msra.mxu0 %v290
        %396 = vmatprep.subr.mxu0 0.0
        %397 = vmatpush1.msra.mxu0 %v291
        %398 = vmatprep.subr.mxu0 0.0
        %399 = vmatpush1.msra.mxu0 %v292
        %400 = vmatprep.subr.mxu0 0.0
        %401 = vmatpush1.msra.mxu0 %v293
        %402 = vmatprep.subr.mxu0 0.0
        %403 = vmatpush1.msra.mxu0 %v294
        %404 = vmatprep.subr.mxu0 0.0
        %405 = vmatpush1.msra.mxu0 %v295
        %406 = vmatprep.subr.mxu0 0.0
        %407 = vmatpush1.msra.mxu0 %v296
        %408 = vmatprep.subr.mxu0 0.0
        %409 = vmatpush1.msra.mxu0 %v297
        %410 = vmatprep.subr.mxu0 0.0
        %411 = vmatpush1.msra.mxu0 %v298
        %412 = vmatprep.subr.mxu0 0.0
        %413 = vmatpush1.msra.mxu0 %v299
        %414 = vmatprep.subr.mxu0 0.0
        %415 = vmatpush1.msra.mxu0 %v300
        %416 = vmatprep.subr.mxu0 0.0
        %417 = vmatpush1.msra.mxu0 %v301
        %418 = vmatprep.subr.mxu0 0.0
        %419 = vmatpush1.msra.mxu0 %v302
        %420 = vmatprep.subr.mxu0 0.0
        %421 = vmatpush1.msra.mxu0 %v303
        %422 = vmatprep.subr.mxu0 0.0
        %423 = vmatpush1.msra.mxu0 %v304
        %424 = vmatprep.subr.mxu0 0.0
        %425 = vmatpush1.msra.mxu0 %v305
        %426 = vmatprep.subr.mxu0 0.0
        %427 = vmatpush1.msra.mxu0 %v306
        %428 = vmatprep.subr.mxu0 0.0
        %429 = vmatpush1.msra.mxu0 %v307
        %430 = vmatprep.subr.mxu0 0.0
        %431 = vmatpush1.msra.mxu0 %v308
        %432 = vmatprep.subr.mxu0 0.0
        %433 = vmatpush1.msra.mxu0 %v309
        %434 = vmatprep.subr.mxu0 0.0
        %435 = vmatpush1.msra.mxu0 %v310
        %436 = vmatprep.subr.mxu0 0.0
        %437 = vmatpush1.msra.mxu0 %v311
        %438 = vmatprep.subr.mxu0 0.0
        %439 = vmatpush1.msra.mxu0 %v312
        %440 = vmatprep.subr.mxu0 0.0
        %441 = vmatpush1.msra.mxu0 %v313
        %442 = vmatprep.subr.mxu0 0.0
        %443 = vmatpush1.msra.mxu0 %v314
        %444 = vmatprep.subr.mxu0 0.0
        %445 = vmatpush1.msra.mxu0 %v315
        %446 = vmatprep.subr.mxu0 0.0
        %447 = vmatpush1.msra.mxu0 %v316
        %448 = vmatprep.subr.mxu0 0.0
        %449 = vmatpush1.msra.mxu0 %v317
        %450 = vmatprep.subr.mxu0 0.0
        %451 = vmatpush1.msra.mxu0 %v318
        %452 = vmatprep.mubr.f32.mxu0 %v255
        %453 = vmatmul.mubr.f32.gmra.mrb[0].mxu0 %v250
        %v454 = vpop.f32.mrb[0].mxu0
        %v455 = vadd.f32 0.0, %v454
        %v456 = vpop.f32.mrb[0].mxu0
        %457 = vdwg.mxu0
        %458 = vmatprep.subr.mxu0 0.0
        %459 = vmatpush1.msra.mxu0 %v319
        %460 = vmatprep.subr.mxu0 0.0
        %461 = vmatpush1.msra.mxu0 %v320
        %462 = vmatprep.subr.mxu0 0.0
        %463 = vmatpush1.msra.mxu0 %v321
        %464 = vmatprep.subr.mxu0 0.0
        %465 = vmatpush1.msra.mxu0 %v322
        %466 = vmatprep.subr.mxu0 0.0
        %467 = vmatpush1.msra.mxu0 %v323
        %468 = vmatprep.subr.mxu0 0.0
        %469 = vmatpush1.msra.mxu0 %v324
        %470 = vmatprep.subr.mxu0 0.0
        %471 = vmatpush1.msra.mxu0 %v325
        %472 = vmatprep.subr.mxu0 0.0
        %473 = vmatpush1.msra.mxu0 %v326
        %474 = vmatprep.subr.mxu0 0.0
        %475 = vmatpush1.msra.mxu0 %v327
        %476 = vmatprep.subr.mxu0 0.0
        %477 = vmatpush1.msra.mxu0 %v328
        %478 = vmatprep.subr.mxu0 0.0
        %479 = vmatpush1.msra.mxu0 %v329
        %480 = vmatprep.subr.mxu0 0.0
        %481 = vmatpush1.msra.mxu0 %v330
        %482 = vmatprep.subr.mxu0 0.0
        %483 = vmatpush1.msra.mxu0 %v331
        %484 = vmatprep.subr.mxu0 0.0
        %485 = vmatpush1.msra.mxu0 %v332
        %486 = vmatprep.subr.mxu0 0.0
        %487 = vmatpush1.msra.mxu0 %v333
        %488 = vmatprep.subr.mxu0 0.0
        %489 = vmatpush1.msra.mxu0 %v334
        %490 = vmatprep.subr.mxu0 0.0
        %491 = vmatpush1.msra.mxu0 %v335
        %492 = vmatprep.subr.mxu0 0.0
        %493 = vmatpush1.msra.mxu0 %v336
        %494 = vmatprep.subr.mxu0 0.0
        %495 = vmatpush1.msra.mxu0 %v337
        %496 = vmatprep.subr.mxu0 0.0
        %497 = vmatpush1.msra.mxu0 %v338
        %498 = vmatprep.subr.mxu0 0.0
        %499 = vmatpush1.msra.mxu0 %v339
        %500 = vmatprep.subr.mxu0 0.0
        %501 = vmatpush1.msra.mxu0 %v340
        %502 = vmatprep.subr.mxu0 0.0
        %503 = vmatpush1.msra.mxu0 %v341
        %504 = vmatprep.subr.mxu0 0.0
        %505 = vmatpush1.msra.mxu0 %v342
        %506 = vmatprep.subr.mxu0 0.0
        %507 = vmatpush1.msra.mxu0 %v343
        %508 = vmatprep.subr.mxu0 0.0
        %509 = vmatpush1.msra.mxu0 %v344
        %510 = vmatprep.subr.mxu0 0.0
        %511 = vmatpush1.msra.mxu0 %v345
        %512 = vmatprep.subr.mxu0 0.0
        %513 = vmatpush1.msra.mxu0 %v346
        %514 = vmatprep.subr.mxu0 0.0
        %515 = vmatpush1.msra.mxu0 %v347
        %516 = vmatprep.subr.mxu0 0.0
        %517 = vmatpush1.msra.mxu0 %v348
        %518 = vmatprep.subr.mxu0 0.0
        %519 = vmatpush1.msra.mxu0 %v349
        %520 = vmatprep.subr.mxu0 0.0
        %521 = vmatpush1.msra.mxu0 %v350
        %522 = vmatprep.mubr.f32.mxu0 %v265
        %523 = vmatmul.mubr.f32.gmra.mrb[0].mxu0 %v260
        %v524 = vpop.f32.mrb[0].mxu0
        %v525 = vadd.f32 %v455, %v524
        %v526 = vpop.f32.mrb[0].mxu0
        %527 = vdwg.mxu0
        %528 = vmatprep.subr.mxu0 0.0
        %529 = vmatpush1.msra.mxu0 %v351
        %530 = vmatprep.subr.mxu0 0.0
        %531 = vmatpush1.msra.mxu0 %v352
        %532 = vmatprep.subr.mxu0 0.0
        %533 = vmatpush1.msra.mxu0 %v353
        %534 = vmatprep.subr.mxu0 0.0
        %535 = vmatpush1.msra.mxu0 %v354
        %536 = vmatprep.subr.mxu0 0.0
        %537 = vmatpush1.msra.mxu0 %v355
        %538 = vmatprep.subr.mxu0 0.0
        %539 = vmatpush1.msra.mxu0 %v356
        %540 = vmatprep.subr.mxu0 0.0
        %541 = vmatpush1.msra.mxu0 %v357
        %542 = vmatprep.subr.mxu0 0.0
        %543 = vmatpush1.msra.mxu0 %v358
        %544 = vmatprep.subr.mxu0 0.0
        %545 = vmatpush1.msra.mxu0 %v359
        %546 = vmatprep.subr.mxu0 0.0
        %547 = vmatpush1.msra.mxu0 %v360
        %548 = vmatprep.subr.mxu0 0.0
        %549 = vmatpush1.msra.mxu0 %v361
        %550 = vmatprep.subr.mxu0 0.0
        %551 = vmatpush1.msra.mxu0 %v362
        %552 = vmatprep.subr.mxu0 0.0
        %553 = vmatpush1.msra.mxu0 %v363
        %554 = vmatprep.subr.mxu0 0.0
        %555 = vmatpush1.msra.mxu0 %v364
        %556 = vmatprep.subr.mxu0 0.0
        %557 = vmatpush1.msra.mxu0 %v365
        %558 = vmatprep.subr.mxu0 0.0
        %559 = vmatpush1.msra.mxu0 %v366
        %560 = vmatprep.subr.mxu0 0.0
        %561 = vmatpush1.msra.mxu0 %v367
        %562 = vmatprep.subr.mxu0 0.0
        %563 = vmatpush1.msra.mxu0 %v368
        %564 = vmatprep.subr.mxu0 0.0
        %565 = vmatpush1.msra.mxu0 %v369
        %566 = vmatprep.subr.mxu0 0.0
        %567 = vmatpush1.msra.mxu0 %v370
        %568 = vmatprep.subr.mxu0 0.0
        %569 = vmatpush1.msra.mxu0 %v371
        %570 = vmatprep.subr.mxu0 0.0
        %571 = vmatpush1.msra.mxu0 %v372
        %572 = vmatprep.subr.mxu0 0.0
        %573 = vmatpush1.msra.mxu0 %v373
        %574 = vmatprep.subr.mxu0 0.0
        %575 = vmatpush1.msra.mxu0 %v374
        %576 = vmatprep.subr.mxu0 0.0
        %577 = vmatpush1.msra.mxu0 %v375
        %578 = vmatprep.subr.mxu0 0.0
        %579 = vmatpush1.msra.mxu0 %v376
        %580 = vmatprep.subr.mxu0 0.0
        %581 = vmatpush1.msra.mxu0 %v377
        %582 = vmatprep.subr.mxu0 0.0
        %583 = vmatpush1.msra.mxu0 %v378
        %584 = vmatprep.subr.mxu0 0.0
        %585 = vmatpush1.msra.mxu0 %v379
        %586 = vmatprep.subr.mxu0 0.0
        %587 = vmatpush1.msra.mxu0 %v380
        %588 = vmatprep.subr.mxu0 0.0
        %589 = vmatpush1.msra.mxu0 %v381
        %590 = vmatprep.subr.mxu0 0.0
        %591 = vmatpush1.msra.mxu0 %v382
        %592 = vmatprep.mubr.f32.mxu0 %v275
        %593 = vmatmul.mubr.f32.gmra.mrb[0].mxu0 %v270
        %v594 = vpop.f32.mrb[0].mxu0
        %v595 = vadd.f32 %v525, %v594
        %v596 = vpop.f32.mrb[0].mxu0
        %597 = vdwg.mxu0
        %598 = vmatprep.subr.mxu0 0.0
        %599 = vmatpush1.msra.mxu0 %v383
        %600 = vmatprep.subr.mxu0 0.0
        %601 = vmatpush1.msra.mxu0 %v384
        %602 = vmatprep.subr.mxu0 0.0
        %603 = vmatpush1.msra.mxu0 0.0
        %604 = vmatprep.subr.mxu0 0.0
        %605 = vmatpush1.msra.mxu0 0.0
        %606 = vmatprep.subr.mxu0 0.0
        %607 = vmatpush1.msra.mxu0 0.0
        %608 = vmatprep.subr.mxu0 0.0
        %609 = vmatpush1.msra.mxu0 0.0
        %610 = vmatprep.subr.mxu0 0.0
        %611 = vmatpush1.msra.mxu0 0.0
        %612 = vmatprep.subr.mxu0 0.0
        %613 = vmatpush1.msra.mxu0 0.0
        %614 = vmatprep.subr.mxu0 0.0
        %615 = vmatpush1.msra.mxu0 0.0
        %616 = vmatprep.subr.mxu0 0.0
        %617 = vmatpush1.msra.mxu0 0.0
        %618 = vmatprep.subr.mxu0 0.0
        %619 = vmatpush1.msra.mxu0 0.0
        %620 = vmatprep.subr.mxu0 0.0
        %621 = vmatpush1.msra.mxu0 0.0
        %622 = vmatprep.subr.mxu0 0.0
        %623 = vmatpush1.msra.mxu0 0.0
        %624 = vmatprep.subr.mxu0 0.0
        %625 = vmatpush1.msra.mxu0 0.0
        %626 = vmatprep.subr.mxu0 0.0
        %627 = vmatpush1.msra.mxu0 0.0
        %628 = vmatprep.subr.mxu0 0.0
        %629 = vmatpush1.msra.mxu0 0.0
        %630 = vmatprep.subr.mxu0 0.0
        %631 = vmatpush1.msra.mxu0 0.0
        %632 = vmatprep.subr.mxu0 0.0
        %633 = vmatpush1.msra.mxu0 0.0
        %634 = vmatprep.subr.mxu0 0.0
        %635 = vmatpush1.msra.mxu0 0.0
        %636 = vmatprep.subr.mxu0 0.0
        %637 = vmatpush1.msra.mxu0 0.0
        %638 = vmatprep.subr.mxu0 0.0
        %639 = vmatpush1.msra.mxu0 0.0
        %640 = vmatprep.subr.mxu0 0.0
        %641 = vmatpush1.msra.mxu0 0.0
        %642 = vmatprep.subr.mxu0 0.0
        %643 = vmatpush1.msra.mxu0 0.0
        %644 = vmatprep.subr.mxu0 0.0
        %645 = vmatpush1.msra.mxu0 0.0
        %646 = vmatprep.subr.mxu0 0.0
        %647 = vmatpush1.msra.mxu0 0.0
        %648 = vmatprep.subr.mxu0 0.0
        %649 = vmatpush1.msra.mxu0 0.0
        %650 = vmatprep.subr.mxu0 0.0
        %651 = vmatpush1.msra.mxu0 0.0
        %652 = vmatprep.subr.mxu0 0.0
        %653 = vmatpush1.msra.mxu0 0.0
        %654 = vmatprep.subr.mxu0 0.0
        %655 = vmatpush1.msra.mxu0 0.0
        %656 = vmatprep.subr.mxu0 0.0
        %657 = vmatpush1.msra.mxu0 0.0
        %658 = vmatprep.subr.mxu0 0.0
        %659 = vmatpush1.msra.mxu0 0.0
        %660 = vmatprep.subr.mxu0 0.0
        %661 = vmatpush1.msra.mxu0 0.0
        %662 = vmatprep.mubr.f32.mxu0 0.0
        %663 = vmatmul.mubr.f32.gmra.mrb[0].mxu0 %v386
        %v664 = vpop.f32.mrb[0].mxu0
        %v665 = vadd.f32 %v595, %v664
        %v666 = vpop.f32.mrb[0].mxu0
        %667 = vdwg.mxu0
        %v668 = vld [vmem:[%s2] sm:$0x1]
        %v670 = vlaneseq
        %v671 = vshrl.u32 %v670, 7
        %v672 = vsub.s32 0, %v671
        %v673 = vrot.slane %v668, %v672
        %v675 = vadd.f32 %v286, %v673
        %v676 = vmul.f32 %v665, 2.0
        %v677 = vsub.f32 %v675, %v676
        %v678 = vmax.f32 %v677, 0.0
        %v679 = vrsqrt.pop %v678
        %v680 = vmul.f32 %v678, %v679
        %vm681 = vcmp.eq.f32.partialorder %v678, inf
        %v682 = vsel %vm681, %v678, %v680
        %vm683 = vcmp.eq.f32.partialorder %v678, 0.0
        %v684 = vand.u32 %v678, 2147483648
        %v685 = vsel %vm683, %v684, %v682
        %v686 = vld [vmem:[%s3] sm:$0x1]
        %v687 = vsub.f32 0.0, %v686
        %v689 = vlaneseq
        %v690 = vshrl.u32 %v689, 7
        %v691 = vsub.s32 0, %v690
        %v692 = vrot.slane %v687, %v691
        %v694 = vmul.f32 %v692, %v685
        %v695 = vmul.f32 %v694, 1.442695
        %v696 = vpow.pop %v695
        %v697 = vld [vmem:[%s4] sm:$0xff]
        %v698 = vld [vmem:[%s4 + $0x8] sm:$0x3]
        %v699 = vld [vmem:[%s5] sm:$0x1]
        %v701 = vlaneseq
        %v702 = vshrl.u32 %v701, 7
        %v703 = vsub.s32 0, %v702
        %v704 = vrot.slane %v699, %v703
        %vm706 = vcmask 80896
        %v708 = vsel %vm706, %v696, 0
        %vm710 = vcmask 1041408
        %v712 = vsel %vm710, %v698, 0
        %714 = vmatprep.subr.mxu0 0.0
        %715 = vmatpush1.msra.mxu0 %v697
        %716 = vmatprep.subr.mxu0 0.0
        %717 = vmatpush1.msra.mxu0 %v712
        %718 = vmatprep.subr.mxu0 0.0
        %719 = vmatpush1.msra.mxu0 0.0
        %720 = vmatprep.subr.mxu0 0.0
        %721 = vmatpush1.msra.mxu0 0.0
        %722 = vmatprep.subr.mxu0 0.0
        %723 = vmatpush1.msra.mxu0 0.0
        %724 = vmatprep.subr.mxu0 0.0
        %725 = vmatpush1.msra.mxu0 0.0
        %726 = vmatprep.subr.mxu0 0.0
        %727 = vmatpush1.msra.mxu0 0.0
        %728 = vmatprep.subr.mxu0 0.0
        %729 = vmatpush1.msra.mxu0 0.0
        %730 = vmatprep.subr.mxu0 0.0
        %731 = vmatpush1.msra.mxu0 0.0
        %732 = vmatprep.subr.mxu0 0.0
        %733 = vmatpush1.msra.mxu0 0.0
        %734 = vmatprep.subr.mxu0 0.0
        %735 = vmatpush1.msra.mxu0 0.0
        %736 = vmatprep.subr.mxu0 0.0
        %737 = vmatpush1.msra.mxu0 0.0
        %738 = vmatprep.subr.mxu0 0.0
        %739 = vmatpush1.msra.mxu0 0.0
        %740 = vmatprep.subr.mxu0 0.0
        %741 = vmatpush1.msra.mxu0 0.0
        %742 = vmatprep.subr.mxu0 0.0
        %743 = vmatpush1.msra.mxu0 0.0
        %744 = vmatprep.subr.mxu0 0.0
        %745 = vmatpush1.msra.mxu0 0.0
        %746 = vmatprep.subr.mxu0 0.0
        %747 = vmatpush1.msra.mxu0 0.0
        %748 = vmatprep.subr.mxu0 0.0
        %749 = vmatpush1.msra.mxu0 0.0
        %750 = vmatprep.subr.mxu0 0.0
        %751 = vmatpush1.msra.mxu0 0.0
        %752 = vmatprep.subr.mxu0 0.0
        %753 = vmatpush1.msra.mxu0 0.0
        %754 = vmatprep.subr.mxu0 0.0
        %755 = vmatpush1.msra.mxu0 0.0
        %756 = vmatprep.subr.mxu0 0.0
        %757 = vmatpush1.msra.mxu0 0.0
        %758 = vmatprep.subr.mxu0 0.0
        %759 = vmatpush1.msra.mxu0 0.0
        %760 = vmatprep.subr.mxu0 0.0
        %761 = vmatpush1.msra.mxu0 0.0
        %762 = vmatprep.subr.mxu0 0.0
        %763 = vmatpush1.msra.mxu0 0.0
        %764 = vmatprep.subr.mxu0 0.0
        %765 = vmatpush1.msra.mxu0 0.0
        %766 = vmatprep.subr.mxu0 0.0
        %767 = vmatpush1.msra.mxu0 0.0
        %768 = vmatprep.subr.mxu0 0.0
        %769 = vmatpush1.msra.mxu0 0.0
        %770 = vmatprep.subr.mxu0 0.0
        %771 = vmatpush1.msra.mxu0 0.0
        %772 = vmatprep.subr.mxu0 0.0
        %773 = vmatpush1.msra.mxu0 0.0
        %774 = vmatprep.subr.mxu0 0.0
        %775 = vmatpush1.msra.mxu0 0.0
        %776 = vmatprep.subr.mxu0 0.0
        %777 = vmatpush1.msra.mxu0 0.0
        %778 = vmatprep.mubr.f32.mxu0 0.0
        %779 = vmatmul.mubr.f32.gmra.mrb[0].mxu0 %v708
        %v780 = vpop.f32.mrb[0].mxu0
        %v781 = vadd.f32 %v704, %v780
        %v782 = vpop.f32.mrb[0].mxu0
        %783 = vdwg.mxu0
        %784 = vst.msk [vmem:[%s244] sm:$0xff] %vm706, %v781
        %s785 = sand.u32 %s159, 1
        %s786 = scalar_lea.sflag [#allocation3], %s785
        %s787 = sand.u32 %s159, 1
        %s788 = smul.addr %s787, 8
        %s789 = scalar_lea.vmem [#allocation2], %s788
        // Predicated region
        $region45: #{rbf_net_forward.1} parent=43 // pred_check
          %p790 = pneg %p169
        $region46: #{rbf_net_forward.1} parent=43 // pred_check_branch
          %792 = sbr.rel (%p790) target = $region48
        $region47: #{rbf_net_forward.1} parent=43 // pred_region
          %s794 = ssub.s32 128, 128
          %795 = vsyncadd %s786, %s794
          %s796 = smul.addr %s20, 128
          %s797 = scalar_lea.hbm %s6, %s796
          %s799 = sshll.u32 %s789, 4
          %s800 = int_to_ptr.vmem [resolvable:$true] %s799
          %802 = dma.vmem_to_hbm [thread:$0]  %s800, 128, %s797, %s786
        $region48: #{rbf_net_forward.1} parent=43 // pred_fallthru
          _
      $region44: #{rbf_net_forward.1} parent=5 // pred_fallthru
        _
      %p803 = scmp.le.s32.totalorder 2, %s15
      // Predicated region
      $region49: #{rbf_net_forward.1} parent=5 // pred_check
        %p804 = pneg %p803
      $region50: #{rbf_net_forward.1} parent=5 // pred_check_branch
        %806 = sbr.rel (%p804) target = $region52
      $region51: #{rbf_net_forward.1} parent=5 // pred_region
        %s807 = ssub.s32 %s15, 2
        // Predicated region
        $region53: #{rbf_net_forward.1} parent=51 // pred_check
          %p808 = pneg %p175
        $region54: #{rbf_net_forward.1} parent=51 // pred_check_branch
          %810 = sbr.rel (%p808) target = $region56
        $region55: #{rbf_net_forward.1} parent=51 // pred_region
          %s811 = sand.u32 %s160, 1
          %s812 = scalar_lea.sflag [#allocation3], %s811
          %s813 = sand.u32 %s160, 1
          %s814 = smul.addr %s813, 8
          %s815 = scalar_lea.vmem [#allocation2], %s814
          %816 = dma.done %s812, 128
        $region56: #{rbf_net_forward.1} parent=51 // pred_fallthru
          _
      $region52: #{rbf_net_forward.1} parent=5 // pred_fallthru
        _
    $region6: #{rbf_net_forward.1} parent=1 // loop_footer
      %s19 = sadd.s32 1, %s15
    $region7: #{rbf_net_forward.1} parent=1 // loop_footer_branch
      %14 = sbr.rel target = $region3
    $region8: #{rbf_net_forward.1} parent=1 // loop_exit
      _
    %817 = vsyncpa [#allocation3], 1
    %s818 = scalar_lea.sflag [#allocation3], 1
    %819 = vsyncpa %s818, 1

</llo_original>
